<compile_context>
chip_gen: v6e
topology: v6e:2x2x1
jax: 0.10.0
libtpu: 0.0.40
codegen_flags: <defaults>
</compile_context>

<pallas_src>
import jax
import jax.numpy as jnp
from jax import lax
from jax.experimental import pallas as pl
from jax.experimental.pallas import tpu as pltpu


def conv3x3_relu_kernel(x_ref, w_ref, b_ref, o_ref):
    """Whole batch in one grid step.

    x_ref : (N, H+2, WP*Cin)     zero-padded, lane-packed NHWC input (VMEM)
    w_ref : (3*WP*Cin, W*Cout)   Toeplitz-expanded conv weight (K x Nout)
    b_ref : (1, W*Cout)          bias tiled along W
    o_ref : (N*H, W*Cout)        lane-dense output slab
    """
    _, hp2, wpcin = x_ref.shape
    nh, _ = o_ref.shape
    h = hp2 - 2

    # In-kernel im2col along kernel height: three row-shifted slabs, each
    # exactly 128 lanes wide, concatenated on the lane (K) axis.  Gives one
    # MXU matmul with K = 3*WP*Cin instead of nine K=Cin matmuls.
    slab = jnp.concatenate(
        [x_ref[:, kh:kh + h, :].reshape(nh, wpcin) for kh in range(3)],
        axis=-1)                                          # (N*H, 3*WP*Cin)

    acc = jnp.dot(slab, w_ref[...],
                  preferred_element_type=jnp.float32)     # (N*H, W*Cout)
    acc = acc + b_ref[...]                                # bias (f32, VPU)
    o_ref[...] = jnp.maximum(acc, 0.0).astype(o_ref.dtype)  # ReLU, full-lane store


def custom_data_parallel_forward(x_nchw, weight_oihw, bias):
    """Forward of CustomDataParallel(m) with m = Conv2d(3x3, pad=1) + ReLU.

    x_nchw      : (N, Cin, H, W)  float32
    weight_oihw : (Cout, Cin, 3, 3)
    bias        : (Cout,)
    returns     : (N, Cout, H, W)
    """
    N, Cin, H, W = x_nchw.shape
    Cout = weight_oihw.shape[0]
    KH = KW = 3

    # Choose padded width WP so WP*Cin is a multiple of 128 (vreg lane width)
    # when Cin divides 128 -> aligned lane packing, aligned in-kernel concat.
    if 128 % Cin == 0:
        cols_per_vreg = 128 // Cin
        WP = -(-(W + 2) // cols_per_vreg) * cols_per_vreg
    else:
        WP = W + 2

    # ---- activation-side glue: one transpose + one pad + free reshape ----
    x_nhwc = jnp.transpose(x_nchw, (0, 2, 3, 1))                    # (N,H,W,Cin)
    x_pad = jnp.pad(x_nhwc, ((0, 0), (1, 1), (1, WP - W - 1), (0, 0)))
    x_packed = x_pad.reshape(N, H + 2, WP * Cin)                    # (N,H+2,128)

    # ---- parameter-side glue (one-off): Toeplitz-expand the 3x3 weight ----
    # w_toep[kh*WP*Cin + wp*Cin + cin, w*Cout + c]
    #     = weight[c, cin, kh, wp - w]   if 0 <= wp - w < 3, else 0
    w_hwio = jnp.transpose(weight_oihw, (2, 3, 1, 0))               # (KH,KW,Cin,Cout)
    wp_i = jnp.arange(WP)[:, None]                                  # (WP,1)
    w_i = jnp.arange(W)[None, :]                                    # (1,W)
    kw_i = wp_i - w_i                                               # (WP,W)
    valid = (kw_i >= 0) & (kw_i < KW)
    g = w_hwio[:, jnp.clip(kw_i, 0, KW - 1), :, :]                  # (KH,WP,W,Cin,Cout)
    g = jnp.where(valid[None, :, :, None, None], g, 0.0)
    w_toep = jnp.transpose(g, (0, 1, 3, 2, 4)).reshape(KH * WP * Cin, W * Cout)

    b_tiled = jnp.tile(bias, W).reshape(1, W * Cout)                # (1, W*Cout)

    out2d = pl.pallas_call(
        conv3x3_relu_kernel,
        out_shape=jax.ShapeDtypeStruct((N * H, W * Cout), x_nchw.dtype),
        grid=(1,),
        in_specs=[
            pl.BlockSpec((N, H + 2, WP * Cin), lambda i: (0, 0, 0)),
            pl.BlockSpec((KH * WP * Cin, W * Cout), lambda i: (0, 0)),
            pl.BlockSpec((1, W * Cout), lambda i: (0, 0)),
        ],
        out_specs=pl.BlockSpec((N * H, W * Cout), lambda i: (0, 0)),
        compiler_params=pltpu.CompilerParams(
            dimension_semantics=("arbitrary",)),
    )(x_packed, w_toep, b_tiled)

    # (N*H, W*Cout) -> (N, H, W, Cout) is a free row-major reshape; one
    # transpose back to the PyTorch NCHW output convention.
    return jnp.transpose(out2d.reshape(N, H, W, Cout), (0, 3, 1, 2))


def _reference_forward(x_nchw, weight_oihw, bias):
    out = lax.conv_general_dilated(
        x_nchw, weight_oihw,
        window_strides=(1, 1), padding="SAME",
        dimension_numbers=("NCHW", "OIHW", "NCHW"))
    out = out + bias.reshape(1, -1, 1, 1)
    return jnp.maximum(out, 0.0)


if __name__ == "__main__":
    # Deterministic parameter init (synthetic; no checkpoint load).
    key = jax.random.PRNGKey(0)
    kx, kw, kb = jax.random.split(key, 3)

    N, Cin, H, W, Cout = 2, 4, 16, 16, 8
    x = jax.random.normal(kx, (N, Cin, H, W), dtype=jnp.float32)
    weight = jax.random.normal(kw, (Cout, Cin, 3, 3), dtype=jnp.float32) * 0.1
    bias = jax.random.normal(kb, (Cout,), dtype=jnp.float32) * 0.1

    fwd = jax.jit(custom_data_parallel_forward)
    out = jax.block_until_ready(fwd(x, weight, bias))

    ref = _reference_forward(x, weight, bias)
    assert out.shape == (N, Cout, H, W)
    assert jnp.allclose(out, ref, atol=1e-4, rtol=1e-4)

    # TODO(synk): nn.DataParallel's multi-GPU scatter/replicate/gather has no
    # single-device compute content; it is treated as the identity wrapper.
    print("KERNEL_OK")
</pallas_src>

<mosaic_0001>
module attributes {stable_mosaic.version = 11 : i64} {
  func.func @conv3x3_relu_kernel(%arg0: i32, %arg1: memref<2x18x128xf32, #tpu.memory_space<vmem>>, %arg2: memref<384x128xf32, #tpu.memory_space<vmem>>, %arg3: memref<1x128xf32, #tpu.memory_space<vmem>>, %arg4: memref<32x128xf32, #tpu.memory_space<vmem>>) attributes {dimension_semantics = [#tpu.dimension_semantics<arbitrary>], iteration_bounds = array<i64: 1>, scalar_prefetch = 0 : i64, scratch_operands = 0 : i64, tpu.core_type = #tpu.core_type<tc>, window_params = [{pipeline_mode = #tpu.pipeline_mode<synchronous>, transform_indices = @transform_0, window_bounds = array<i64: 2, 18, 128>}, {pipeline_mode = #tpu.pipeline_mode<synchronous>, transform_indices = @transform_1, window_bounds = array<i64: 384, 128>}, {pipeline_mode = #tpu.pipeline_mode<synchronous>, transform_indices = @transform_2, window_bounds = array<i64: 1, 128>}, {pipeline_mode = #tpu.pipeline_mode<synchronous>, transform_indices = @transform_3, window_bounds = array<i64: 32, 128>}]} {
    %c0 = arith.constant 0 : index
    %c0_0 = arith.constant 0 : index
    %c0_1 = arith.constant 0 : index
    %0 = vector.load %arg1[%c0, %c0_0, %c0_1] : memref<2x18x128xf32, #tpu.memory_space<vmem>>, vector<2x16x128xf32>
    %1 = vector.shape_cast %0 : vector<2x16x128xf32> to vector<32x128xf32>
    %c0_2 = arith.constant 0 : index
    %c1 = arith.constant 1 : index
    %c0_3 = arith.constant 0 : index
    %2 = vector.load %arg1[%c0_2, %c1, %c0_3] : memref<2x18x128xf32, #tpu.memory_space<vmem>>, vector<2x16x128xf32>
    %3 = vector.shape_cast %2 : vector<2x16x128xf32> to vector<32x128xf32>
    %c0_4 = arith.constant 0 : index
    %c2 = arith.constant 2 : index
    %c0_5 = arith.constant 0 : index
    %4 = vector.load %arg1[%c0_4, %c2, %c0_5] : memref<2x18x128xf32, #tpu.memory_space<vmem>>, vector<2x16x128xf32>
    %5 = vector.shape_cast %4 : vector<2x16x128xf32> to vector<32x128xf32>
    %6 = tpu.concatenate %1, %3, %5 in 1 : vector<32x128xf32>, vector<32x128xf32>, vector<32x128xf32> -> vector<32x384xf32>
    %c0_6 = arith.constant 0 : index
    %c0_7 = arith.constant 0 : index
    %7 = vector.load %arg2[%c0_6, %c0_7] : memref<384x128xf32, #tpu.memory_space<vmem>>, vector<384x128xf32>
    %cst = arith.constant dense<0.000000e+00> : vector<32x128xf32>
    %8 = tpu.matmul %6, %7, %cst {dimension_numbers = #tpu.dot_dimension_numbers<[1], [0], [0], [1], [0, 0, 1, 1], [], []>} : vector<32x384xf32>, vector<384x128xf32>, vector<32x128xf32> -> vector<32x128xf32>
    %c0_8 = arith.constant 0 : index
    %c0_9 = arith.constant 0 : index
    %9 = vector.load %arg3[%c0_8, %c0_9] : memref<1x128xf32, #tpu.memory_space<vmem>>, vector<1x128xf32>
    %10 = vector.broadcast %9 : vector<1x128xf32> to vector<32x128xf32>
    %11 = arith.addf %8, %10 : vector<32x128xf32>
    %cst_10 = arith.constant 0.000000e+00 : f32
    %12 = vector.broadcast %cst_10 : f32 to vector<32x128xf32>
    %13 = arith.maximumf %11, %12 : vector<32x128xf32>
    %c0_11 = arith.constant 0 : index
    %c0_12 = arith.constant 0 : index
    %14 = vector.load %arg4[%c0_11, %c0_12] : memref<32x128xf32, #tpu.memory_space<vmem>>, vector<32x128xf32>
    tpu.vector_store %arg4[%c0_11, %c0_12], %13 {strides = array<i32>} : memref<32x128xf32, #tpu.memory_space<vmem>>, vector<32x128xf32>,
    return
  }
  func.func @transform_0(%arg0: i32) -> (i32, i32, i32) {
    %c0_i32 = arith.constant 0 : i32
    %c0_i32_0 = arith.constant 0 : i32
    %c0_i32_1 = arith.constant 0 : i32
    %c0_i32_2 = arith.constant 0 : i32
    return %c0_i32, %c0_i32_0, %c0_i32_1 : i32, i32, i32
  }
  func.func @transform_1(%arg0: i32) -> (i32, i32) {
    %c0_i32 = arith.constant 0 : i32
    %c0_i32_0 = arith.constant 0 : i32
    %c0_i32_1 = arith.constant 0 : i32
    return %c0_i32, %c0_i32_0 : i32, i32
  }
  func.func @transform_2(%arg0: i32) -> (i32, i32) {
    %c0_i32 = arith.constant 0 : i32
    %c0_i32_0 = arith.constant 0 : i32
    %c0_i32_1 = arith.constant 0 : i32
    return %c0_i32, %c0_i32_0 : i32, i32
  }
  func.func @transform_3(%arg0: i32) -> (i32, i32) {
    %c0_i32 = arith.constant 0 : i32
    %c0_i32_0 = arith.constant 0 : i32
    %c0_i32_1 = arith.constant 0 : i32
    return %c0_i32, %c0_i32_0 : i32, i32
  }
}

</mosaic_0001>

<llo_original>
// kernel: tile.8
$region0: #{tile.8}
  #allocation0 [shape = 's32[1]{0}', space=sflag, size = 0x4, scoped, tag = 'scoped memory for tile.8']
  %s0 = inlined_call_operand.vmem [shape: f32[8], index: 0, kind: input, shape index: {}]
  %s1 = inlined_call_operand.vmem [shape: f32[16,8], index: 1, kind: output, shape index: {}]
  // Predicated region
  $region2: #{tile.8} parent=0 // pred_check
    _
  $region3: #{tile.8} parent=0 // pred_check_branch
    %3 = sbr.rel (0) target = $region5
  $region4: #{tile.8} parent=0 // pred_region
    _
  $region5: #{tile.8} parent=0 // pred_fallthru
    _
  %v4 = vld [vmem:[%s0] ss:$0 sm:$0xff]
  %5 = vst [vmem:[%s1] sm:$0xff] %v4
  %s6 = scalar_lea.vmem %s1, 8
  %7 = vst [vmem:[%s6] sm:$0xff] %v4

// kernel: tile.9
$region0: #{tile.9}
  %s0 = inlined_call_operand.vmem [shape: f32[16,8], index: 0, kind: input, shape index: {}]
  %s1 = inlined_call_operand.vmem [shape: f32[1,128], index: 1, kind: output, shape index: {}]
  $region1: #{tile.9} parent=0
    #allocation0 [shape = 'u8[4096]{0}', space=vmem, size = 0x1000, scoped, tag = 'scoped mem for output reshape']
    %v2 = vld [vmem:[%s0] sm:$0x1]
    %vm3 = vcmask 64512
    %4 = vst.msk [vmem:[#allocation0] sm:$0x1] %vm3, %v2
    %s5 = scalar_lea.vmem %s0, 15
    %v6 = vld [vmem:[%s5] sm:$0x1]
    %7 = vrot.lane.b32.xlu0 %v6, 120
    %v8 = vpop.permute.xlu0 %7
    %vm9 = vcmask 1048512
    %10 = vst.msk [vmem:[#allocation0] sm:$0x1] %vm9, %v8
    %s11 = scalar_lea.vmem %s0, 14
    %v12 = vld [vmem:[%s11] sm:$0x1]
    %13 = vrot.lane.b32.xlu0 %v12, 112
    %v14 = vpop.permute.xlu0 %13
    %vm15 = vcmask 982912
    %16 = vst.msk [vmem:[#allocation0] sm:$0x1] %vm15, %v14
    %s17 = scalar_lea.vmem %s0, 13
    %v18 = vld [vmem:[%s17] sm:$0x1]
    %19 = vrot.lane.b32.xlu0 %v18, 104
    %v20 = vpop.permute.xlu0 %19
    %vm21 = vcmask 917312
    %22 = vst.msk [vmem:[#allocation0] sm:$0x1] %vm21, %v20
    %s23 = scalar_lea.vmem %s0, 12
    %v24 = vld [vmem:[%s23] sm:$0x1]
    %25 = vrot.lane.b32.xlu0 %v24, 96
    %v26 = vpop.permute.xlu0 %25
    %vm27 = vcmask 851712
    %28 = vst.msk [vmem:[#allocation0] sm:$0x1] %vm27, %v26
    %s29 = scalar_lea.vmem %s0, 11
    %v30 = vld [vmem:[%s29] sm:$0x1]
    %31 = vrot.lane.b32.xlu0 %v30, 88
    %v32 = vpop.permute.xlu0 %31
    %vm33 = vcmask 786112
    %34 = vst.msk [vmem:[#allocation0] sm:$0x1] %vm33, %v32
    %s35 = scalar_lea.vmem %s0, 10
    %v36 = vld [vmem:[%s35] sm:$0x1]
    %37 = vrot.lane.b32.xlu0 %v36, 80
    %v38 = vpop.permute.xlu0 %37
    %vm39 = vcmask 720512
    %40 = vst.msk [vmem:[#allocation0] sm:$0x1] %vm39, %v38
    %s41 = scalar_lea.vmem %s0, 9
    %v42 = vld [vmem:[%s41] sm:$0x1]
    %43 = vrot.lane.b32.xlu0 %v42, 72
    %v44 = vpop.permute.xlu0 %43
    %vm45 = vcmask 654912
    %46 = vst.msk [vmem:[#allocation0] sm:$0x1] %vm45, %v44
    %s47 = scalar_lea.vmem %s0, 8
    %v48 = vld [vmem:[%s47] sm:$0x1]
    %49 = vrot.lane.b32.xlu0 %v48, 64
    %v50 = vpop.permute.xlu0 %49
    %vm51 = vcmask 589312
    %52 = vst.msk [vmem:[#allocation0] sm:$0x1] %vm51, %v50
    %s53 = scalar_lea.vmem %s0, 7
    %v54 = vld [vmem:[%s53] sm:$0x1]
    %55 = vrot.lane.b32.xlu0 %v54, 56
    %v56 = vpop.permute.xlu0 %55
    %vm57 = vcmask 523712
    %58 = vst.msk [vmem:[#allocation0] sm:$0x1] %vm57, %v56
    %s59 = scalar_lea.vmem %s0, 6
    %v60 = vld [vmem:[%s59] sm:$0x1]
    %61 = vrot.lane.b32.xlu0 %v60, 48
    %v62 = vpop.permute.xlu0 %61
    %vm63 = vcmask 458112
    %64 = vst.msk [vmem:[#allocation0] sm:$0x1] %vm63, %v62
    %s65 = scalar_lea.vmem %s0, 5
    %v66 = vld [vmem:[%s65] sm:$0x1]
    %67 = vrot.lane.b32.xlu0 %v66, 40
    %v68 = vpop.permute.xlu0 %67
    %vm69 = vcmask 392512
    %70 = vst.msk [vmem:[#allocation0] sm:$0x1] %vm69, %v68
    %s71 = scalar_lea.vmem %s0, 4
    %v72 = vld [vmem:[%s71] sm:$0x1]
    %73 = vrot.lane.b32.xlu0 %v72, 32
    %v74 = vpop.permute.xlu0 %73
    %vm75 = vcmask 326912
    %76 = vst.msk [vmem:[#allocation0] sm:$0x1] %vm75, %v74
    %s77 = scalar_lea.vmem %s0, 3
    %v78 = vld [vmem:[%s77] sm:$0x1]
    %79 = vrot.lane.b32.xlu0 %v78, 24
    %v80 = vpop.permute.xlu0 %79
    %vm81 = vcmask 261312
    %82 = vst.msk [vmem:[#allocation0] sm:$0x1] %vm81, %v80
    %s83 = scalar_lea.vmem %s0, 2
    %v84 = vld [vmem:[%s83] sm:$0x1]
    %85 = vrot.lane.b32.xlu0 %v84, 16
    %v86 = vpop.permute.xlu0 %85
    %vm87 = vcmask 195712
    %88 = vst.msk [vmem:[#allocation0] sm:$0x1] %vm87, %v86
    %s89 = scalar_lea.vmem %s0, 1
    %v90 = vld [vmem:[%s89] sm:$0x1]
    %91 = vrot.lane.b32.xlu0 %v90, 8
    %v92 = vpop.permute.xlu0 %91
    %vm93 = vcmask 130112
    %94 = vst.msk [vmem:[#allocation0] sm:$0x1] %vm93, %v92
    %s96 = sshll.u32 1, 1
    %s97 = ssub.s32 %s96, 1
    %v99 = vld [vmem:[#allocation0] sm:%s97]
    %s100 = sshll.u32 1, 1
    %s101 = ssub.s32 %s100, 1
    %102 = vst [vmem:[%s1] sm:%s101] %v99

// kernel: custom_data_parallel_forward.1
$region0: #{custom_data_parallel_forward.1}
  #allocation0 [shape = 'u32[]', space=smem, size = 0x4, offset = 0x4, fixed_abs, tag = 'smem constant byte address 0x4 - core index']
  #allocation1 [shape = 'u32[144,128]{1,0:T(1,128)}', space=vmem, size = 0x12000, scoped, tag = 'internal scratch']
  %s0 = inlined_call_operand.vmem [shape: f32[2,18,128], index: 0, kind: input, shape index: {}]
  %s1 = inlined_call_operand.vmem [shape: f32[384,128], index: 1, kind: input, shape index: {}]
  %s2 = inlined_call_operand.vmem [shape: f32[1,128], index: 2, kind: input, shape index: {}]
  %s3 = inlined_call_operand.vmem [shape: f32[32,128], index: 3, kind: output, shape index: {}]
  %s4 = sld [smem:[#allocation0]]
  $region22: #{custom_data_parallel_forward.1} parent=0
    _
  %s6 = ssub.s32 1, %s4
  %s7 = scalar_select 0, %s6, %s4
  // Predicated region
  $region2: #{custom_data_parallel_forward.1} parent=0 // pred_check
    _
  $region3: #{custom_data_parallel_forward.1} parent=0 // pred_check_branch
    %9 = sbr.rel (0) target = $region5
  $region4: #{custom_data_parallel_forward.1} parent=0 // pred_region
    _
  $region5: #{custom_data_parallel_forward.1} parent=0 // pred_fallthru
    _
  // Predicated region
  $region6: #{custom_data_parallel_forward.1} parent=0 // pred_check
    _
  $region7: #{custom_data_parallel_forward.1} parent=0 // pred_check_branch
    %11 = sbr.rel (0) target = $region9
  $region8: #{custom_data_parallel_forward.1} parent=0 // pred_region
    _
  $region9: #{custom_data_parallel_forward.1} parent=0 // pred_fallthru
    _
  // Predicated region
  $region10: #{custom_data_parallel_forward.1} parent=0 // pred_check
    _
  $region11: #{custom_data_parallel_forward.1} parent=0 // pred_check_branch
    %13 = sbr.rel (0) target = $region13
  $region12: #{custom_data_parallel_forward.1} parent=0 // pred_region
    _
  $region13: #{custom_data_parallel_forward.1} parent=0 // pred_fallthru
    _
  %v14 = vld [vmem:[%s0] sm:$0xff]
  %v15 = vld [vmem:[%s0 + $0x8] sm:$0xff]
  %v16 = vld [vmem:[%s0 + $0x18] sm:$0xff]
  %v17 = vld [vmem:[%s0 + $0x20] sm:$0xff]
  %v18 = vld [vmem:[%s0 + $0x1] sm:$0xff]
  %v19 = vld [vmem:[%s0 + $0x9] sm:$0xff]
  %v20 = vld [vmem:[%s0 + $0x19] sm:$0xff]
  %v21 = vld [vmem:[%s0 + $0x21] sm:$0xff]
  %v22 = vld [vmem:[%s0 + $0x2] sm:$0xff]
  %v23 = vld [vmem:[%s0 + $0xa] sm:$0xff]
  %v24 = vld [vmem:[%s0 + $0x1a] sm:$0xff]
  %v25 = vld [vmem:[%s0 + $0x22] sm:$0xff]
  %v26 = vld [vmem:[%s1] sm:$0xff]
  %v27 = vld [vmem:[%s1 + $0x8] sm:$0xff]
  %v28 = vld [vmem:[%s1 + $0x10] sm:$0xff]
  %v29 = vld [vmem:[%s1 + $0x18] sm:$0xff]
  %v30 = vld [vmem:[%s1 + $0x20] sm:$0xff]
  %v31 = vld [vmem:[%s1 + $0x28] sm:$0xff]
  %v32 = vld [vmem:[%s1 + $0x30] sm:$0xff]
  %v33 = vld [vmem:[%s1 + $0x38] sm:$0xff]
  %v34 = vld [vmem:[%s1 + $0x40] sm:$0xff]
  %v35 = vld [vmem:[%s1 + $0x48] sm:$0xff]
  %v36 = vld [vmem:[%s1 + $0x50] sm:$0xff]
  %v37 = vld [vmem:[%s1 + $0x58] sm:$0xff]
  %v38 = vld [vmem:[%s1 + $0x60] sm:$0xff]
  %v39 = vld [vmem:[%s1 + $0x68] sm:$0xff]
  %v40 = vld [vmem:[%s1 + $0x70] sm:$0xff]
  %v41 = vld [vmem:[%s1 + $0x78] sm:$0xff]
  %v42 = vld [vmem:[%s1 + $0x80] sm:$0xff]
  %v43 = vld [vmem:[%s1 + $0x88] sm:$0xff]
  %v44 = vld [vmem:[%s1 + $0x90] sm:$0xff]
  %v45 = vld [vmem:[%s1 + $0x98] sm:$0xff]
  %v46 = vld [vmem:[%s1 + $0xa0] sm:$0xff]
  %v47 = vld [vmem:[%s1 + $0xa8] sm:$0xff]
  %v48 = vld [vmem:[%s1 + $0xb0] sm:$0xff]
  %v49 = vld [vmem:[%s1 + $0xb8] sm:$0xff]
  %v50 = vld [vmem:[%s1 + $0xc0] sm:$0xff]
  %v51 = vld [vmem:[%s1 + $0xc8] sm:$0xff]
  %v52 = vld [vmem:[%s1 + $0xd0] sm:$0xff]
  %v53 = vld [vmem:[%s1 + $0xd8] sm:$0xff]
  %v54 = vld [vmem:[%s1 + $0xe0] sm:$0xff]
  %v55 = vld [vmem:[%s1 + $0xe8] sm:$0xff]
  %v56 = vld [vmem:[%s1 + $0xf0] sm:$0xff]
  %v57 = vld [vmem:[%s1 + $0xf8] sm:$0xff]
  %v58 = vld [vmem:[%s1 + $0x100] sm:$0xff]
  %v59 = vld [vmem:[%s1 + $0x108] sm:$0xff]
  %v60 = vld [vmem:[%s1 + $0x110] sm:$0xff]
  %v61 = vld [vmem:[%s1 + $0x118] sm:$0xff]
  %v62 = vld [vmem:[%s1 + $0x120] sm:$0xff]
  %v63 = vld [vmem:[%s1 + $0x128] sm:$0xff]
  %v64 = vld [vmem:[%s1 + $0x130] sm:$0xff]
  %v65 = vld [vmem:[%s1 + $0x138] sm:$0xff]
  %v66 = vld [vmem:[%s1 + $0x140] sm:$0xff]
  %v67 = vld [vmem:[%s1 + $0x148] sm:$0xff]
  %v68 = vld [vmem:[%s1 + $0x150] sm:$0xff]
  %v69 = vld [vmem:[%s1 + $0x158] sm:$0xff]
  %v70 = vld [vmem:[%s1 + $0x160] sm:$0xff]
  %v71 = vld [vmem:[%s1 + $0x168] sm:$0xff]
  %v72 = vld [vmem:[%s1 + $0x170] sm:$0xff]
  %v73 = vld [vmem:[%s1 + $0x178] sm:$0xff]
  %v74 = vld [vmem:[%s2] sm:$0x1]
  %v76 = vlaneseq
  %v77 = vshrl.u32 %v76, 7
  %v78 = vsub.s32 0, %v77
  %v79 = vrot.slane %v74, %v78
  %81 = vmatprep.subr.mxu0 0.0
  %82 = vmatpush1.msra.mxu0 %v41
  %83 = vmatprep.subr.mxu0 0.0
  %84 = vmatpush1.msra.mxu0 %v40
  %85 = vmatprep.subr.mxu0 0.0
  %86 = vmatpush1.msra.mxu0 %v39
  %87 = vmatprep.subr.mxu0 0.0
  %88 = vmatpush1.msra.mxu0 %v38
  %89 = vmatprep.subr.mxu0 0.0
  %90 = vmatpush1.msra.mxu0 %v37
  %91 = vmatprep.subr.mxu0 0.0
  %92 = vmatpush1.msra.mxu0 %v36
  %93 = vmatprep.subr.mxu0 0.0
  %94 = vmatpush1.msra.mxu0 %v35
  %95 = vmatprep.subr.mxu0 0.0
  %96 = vmatpush1.msra.mxu0 %v34
  %97 = vmatprep.subr.mxu0 0.0
  %98 = vmatpush1.msra.mxu0 %v33
  %99 = vmatprep.subr.mxu0 0.0
  %100 = vmatpush1.msra.mxu0 %v32
  %101 = vmatprep.subr.mxu0 0.0
  %102 = vmatpush1.msra.mxu0 %v31
  %103 = vmatprep.subr.mxu0 0.0
  %104 = vmatpush1.msra.mxu0 %v30
  %105 = vmatprep.subr.mxu0 0.0
  %106 = vmatpush1.msra.mxu0 %v29
  %107 = vmatprep.subr.mxu0 0.0
  %108 = vmatpush1.msra.mxu0 %v28
  %109 = vmatprep.subr.mxu0 0.0
  %110 = vmatpush1.msra.mxu0 %v27
  %111 = vmatprep.subr.mxu0 0.0
  %112 = vmatpush1.msra.mxu0 %v26
  %113 = vmatprep.subr.mxu0 0.0
  %114 = vmatpush2.msra.mxu0 %v57
  %115 = vmatprep.subr.mxu0 0.0
  %116 = vmatpush2.msra.mxu0 %v56
  %117 = vmatprep.subr.mxu0 0.0
  %118 = vmatpush2.msra.mxu0 %v55
  %119 = vmatprep.subr.mxu0 0.0
  %120 = vmatpush2.msra.mxu0 %v54
  %121 = vmatprep.subr.mxu0 0.0
  %122 = vmatpush2.msra.mxu0 %v53
  %123 = vmatprep.subr.mxu0 0.0
  %124 = vmatpush2.msra.mxu0 %v52
  %125 = vmatprep.subr.mxu0 0.0
  %126 = vmatpush2.msra.mxu0 %v51
  %127 = vmatprep.subr.mxu0 0.0
  %128 = vmatpush2.msra.mxu0 %v50
  %129 = vmatprep.subr.mxu0 0.0
  %130 = vmatpush2.msra.mxu0 %v49
  %131 = vmatprep.subr.mxu0 0.0
  %132 = vmatpush2.msra.mxu0 %v48
  %133 = vmatprep.subr.mxu0 0.0
  %134 = vmatpush2.msra.mxu0 %v47
  %135 = vmatprep.subr.mxu0 0.0
  %136 = vmatpush2.msra.mxu0 %v46
  %137 = vmatprep.subr.mxu0 0.0
  %138 = vmatpush2.msra.mxu0 %v45
  %139 = vmatprep.subr.mxu0 0.0
  %140 = vmatpush2.msra.mxu0 %v44
  %141 = vmatprep.subr.mxu0 0.0
  %142 = vmatpush2.msra.mxu0 %v43
  %143 = vmatprep.subr.mxu0 0.0
  %144 = vmatpush2.msra.mxu0 %v42
  %145 = vmatprep.mubr.f32.mxu0 %v18
  %146 = vmatmul.mubr.f32.gmra.mxu0 %v14
  %v147 = vpop.f32.mrf.mxu0
  %v148 = vadd.f32 %v79, %v147
  %v149 = vpop.f32.mrf.mxu0
  %150 = vmatprep.mubr.f32.mxu0 %v19
  %151 = vmatmul.mubr.f32.gmra.mxu0 %v15
  %v152 = vpop.f32.mrf.mxu0
  %v153 = vadd.f32 %v79, %v152
  %v154 = vpop.f32.mrf.mxu0
  %155 = vmatprep.mubr.f32.mxu0 %v20
  %156 = vmatmul.mubr.f32.gmra.mxu0 %v16
  %v157 = vpop.f32.mrf.mxu0
  %v158 = vadd.f32 %v79, %v157
  %v159 = vpop.f32.mrf.mxu0
  %160 = vmatprep.mubr.f32.mxu0 %v21
  %161 = vmatmul.mubr.f32.gmra.mxu0 %v17
  %v162 = vpop.f32.mrf.mxu0
  %v163 = vadd.f32 %v79, %v162
  %v164 = vpop.f32.mrf.mxu0
  %165 = vdwg.mxu0
  %166 = vmatprep.subr.mxu0 0.0
  %167 = vmatpush1.msra.mxu0 %v73
  %168 = vmatprep.subr.mxu0 0.0
  %169 = vmatpush1.msra.mxu0 %v72
  %170 = vmatprep.subr.mxu0 0.0
  %171 = vmatpush1.msra.mxu0 %v71
  %172 = vmatprep.subr.mxu0 0.0
  %173 = vmatpush1.msra.mxu0 %v70
  %174 = vmatprep.subr.mxu0 0.0
  %175 = vmatpush1.msra.mxu0 %v69
  %176 = vmatprep.subr.mxu0 0.0
  %177 = vmatpush1.msra.mxu0 %v68
  %178 = vmatprep.subr.mxu0 0.0
  %179 = vmatpush1.msra.mxu0 %v67
  %180 = vmatprep.subr.mxu0 0.0
  %181 = vmatpush1.msra.mxu0 %v66
  %182 = vmatprep.subr.mxu0 0.0
  %183 = vmatpush1.msra.mxu0 %v65
  %184 = vmatprep.subr.mxu0 0.0
  %185 = vmatpush1.msra.mxu0 %v64
  %186 = vmatprep.subr.mxu0 0.0
  %187 = vmatpush1.msra.mxu0 %v63
  %188 = vmatprep.subr.mxu0 0.0
  %189 = vmatpush1.msra.mxu0 %v62
  %190 = vmatprep.subr.mxu0 0.0
  %191 = vmatpush1.msra.mxu0 %v61
  %192 = vmatprep.subr.mxu0 0.0
  %193 = vmatpush1.msra.mxu0 %v60
  %194 = vmatprep.subr.mxu0 0.0
  %195 = vmatpush1.msra.mxu0 %v59
  %196 = vmatprep.subr.mxu0 0.0
  %197 = vmatpush1.msra.mxu0 %v58
  %198 = vmatprep.subr.mxu0 0.0
  %199 = vmatpush2.msra.mxu0 0.0
  %200 = vmatprep.subr.mxu0 0.0
  %201 = vmatpush2.msra.mxu0 0.0
  %202 = vmatprep.subr.mxu0 0.0
  %203 = vmatpush2.msra.mxu0 0.0
  %204 = vmatprep.subr.mxu0 0.0
  %205 = vmatpush2.msra.mxu0 0.0
  %206 = vmatprep.subr.mxu0 0.0
  %207 = vmatpush2.msra.mxu0 0.0
  %208 = vmatprep.subr.mxu0 0.0
  %209 = vmatpush2.msra.mxu0 0.0
  %210 = vmatprep.subr.mxu0 0.0
  %211 = vmatpush2.msra.mxu0 0.0
  %212 = vmatprep.subr.mxu0 0.0
  %213 = vmatpush2.msra.mxu0 0.0
  %214 = vmatprep.subr.mxu0 0.0
  %215 = vmatpush2.msra.mxu0 0.0
  %216 = vmatprep.subr.mxu0 0.0
  %217 = vmatpush2.msra.mxu0 0.0
  %218 = vmatprep.subr.mxu0 0.0
  %219 = vmatpush2.msra.mxu0 0.0
  %220 = vmatprep.subr.mxu0 0.0
  %221 = vmatpush2.msra.mxu0 0.0
  %222 = vmatprep.subr.mxu0 0.0
  %223 = vmatpush2.msra.mxu0 0.0
  %224 = vmatprep.subr.mxu0 0.0
  %225 = vmatpush2.msra.mxu0 0.0
  %226 = vmatprep.subr.mxu0 0.0
  %227 = vmatpush2.msra.mxu0 0.0
  %228 = vmatprep.subr.mxu0 0.0
  %229 = vmatpush2.msra.mxu0 0.0
  %230 = vmatprep.mubr.f32.mxu0 0.0
  %231 = vmatmul.mubr.f32.gmra.mxu0 %v22
  %v232 = vpop.f32.mrf.mxu0
  %v233 = vadd.f32 %v148, %v232
  %v234 = vpop.f32.mrf.mxu0
  %235 = vmatprep.mubr.f32.mxu0 0.0
  %236 = vmatmul.mubr.f32.gmra.mxu0 %v23
  %v237 = vpop.f32.mrf.mxu0
  %v238 = vadd.f32 %v153, %v237
  %v239 = vpop.f32.mrf.mxu0
  %240 = vmatprep.mubr.f32.mxu0 0.0
  %241 = vmatmul.mubr.f32.gmra.mxu0 %v24
  %v242 = vpop.f32.mrf.mxu0
  %v243 = vadd.f32 %v158, %v242
  %v244 = vpop.f32.mrf.mxu0
  %245 = vmatprep.mubr.f32.mxu0 0.0
  %246 = vmatmul.mubr.f32.gmra.mxu0 %v25
  %v247 = vpop.f32.mrf.mxu0
  %v248 = vadd.f32 %v163, %v247
  %v249 = vpop.f32.mrf.mxu0
  %250 = vdwg.mxu0
  %v251 = vmax.f32 %v233, 0.0
  %v252 = vmax.f32 %v238, 0.0
  %v253 = vmax.f32 %v243, 0.0
  %v254 = vmax.f32 %v248, 0.0
  %255 = vst [vmem:[%s3] sm:$0xff] %v251
  %256 = vst [vmem:[%s3 + $0x8] sm:$0xff] %v252
  %257 = vst [vmem:[%s3 + $0x10] sm:$0xff] %v253
  %258 = vst [vmem:[%s3 + $0x18] sm:$0xff] %v254
  // Predicated region
  $region14: #{custom_data_parallel_forward.1} parent=0 // pred_check
    _
  $region15: #{custom_data_parallel_forward.1} parent=0 // pred_check_branch
    %260 = sbr.rel (0) target = $region17
  $region16: #{custom_data_parallel_forward.1} parent=0 // pred_region
    _
  $region17: #{custom_data_parallel_forward.1} parent=0 // pred_fallthru
    _
  // Predicated region
  $region18: #{custom_data_parallel_forward.1} parent=0 // pred_check
    _
  $region19: #{custom_data_parallel_forward.1} parent=0 // pred_check_branch
    %262 = sbr.rel (0) target = $region21
  $region20: #{custom_data_parallel_forward.1} parent=0 // pred_region
    _
  $region21: #{custom_data_parallel_forward.1} parent=0 // pred_fallthru
    _

</llo_original>
